<compile_context>
chip_gen: v6e
topology: v6e:2x2x1
jax: 0.10.0
libtpu: 0.0.40
codegen_flags: <defaults>
</compile_context>

<pallas_src>
import functools

import jax
import jax.numpy as jnp
from jax import lax
from jax.experimental import pallas as pl
from jax.experimental.pallas import tpu as pltpu

_BF16 = jnp.bfloat16


# ---------------------------------------------------------------------------
# Kernel 1: 1x1 conv as matmul (BN scale pre-folded into weights) + bias [+ReLU]
# ---------------------------------------------------------------------------
def _mm_bias_act_kernel(x_ref, w_ref, b_ref, o_ref, *, relu):
    acc = jnp.dot(x_ref[...], w_ref[...], preferred_element_type=jnp.float32)
    acc = acc + b_ref[...]
    if relu:
        acc = jnp.maximum(acc, 0.0)
    o_ref[...] = acc.astype(o_ref.dtype)


# ---------------------------------------------------------------------------
# Kernel 2: fused conv_c (1x1) + projection shortcut (1x1) + residual + ReLU
#   relu( y @ wc + x_short @ wp + (bias_c + bias_p) )
# ---------------------------------------------------------------------------
def _mm2_bias_relu_kernel(y_ref, wc_ref, xs_ref, wp_ref, b_ref, o_ref):
    acc = jnp.dot(y_ref[...], wc_ref[...], preferred_element_type=jnp.float32)
    acc = acc + jnp.dot(xs_ref[...], wp_ref[...],
                        preferred_element_type=jnp.float32)
    acc = acc + b_ref[...]
    o_ref[...] = jnp.maximum(acc, 0.0).astype(o_ref.dtype)


# ---------------------------------------------------------------------------
# Kernel 3: depthwise 3x3 (stride, pad=1) + bias + ReLU, spatially tiled.
#   Input lives in HBM (pl.ANY); each grid step DMAs a halo'd row strip into a
#   VMEM scratch buffer. Halo rows/cols outside the image are zero-filled in
#   the kernel (no pre-padded copy in HBM).
# ---------------------------------------------------------------------------
def _dw3x3_bias_relu_kernel(x_any, w_ref, b_ref, o_ref, xbuf, sem,
                            *, stride, th, H, W, Wo):
    n = pl.program_id(0)
    t = pl.program_id(1)
    C = w_ref.shape[-1]
    th_in = (th - 1) * stride + 3       # strip rows incl. 3x3 halo
    nmid = th_in - 2                    # rows that are always in-bounds
    row0 = t * (th * stride)            # first in-bounds input row of the strip

    # Width halo (cols 0 and W+1) is never written by DMA -> keep it zero.
    xbuf[:, 0:1, :] = jnp.zeros((th_in, 1, C), xbuf.dtype)
    xbuf[:, W + 1:W + 2, :] = jnp.zeros((th_in, 1, C), xbuf.dtype)

    # Middle rows: always valid.
    cp_mid = pltpu.make_async_copy(x_any.at[n, pl.ds(row0, nmid)],
                                   xbuf.at[pl.ds(1, nmid), pl.ds(1, W)],
                                   sem.at[0])
    cp_mid.start()

    # Top halo row (image row row0 - 1).
    @pl.when(row0 > 0)
    def _():
        pltpu.make_async_copy(x_any.at[n, pl.ds(row0 - 1, 1)],
                              xbuf.at[pl.ds(0, 1), pl.ds(1, W)],
                              sem.at[1]).start()

    @pl.when(row0 == 0)
    def _():
        xbuf[0:1, 1:W + 1, :] = jnp.zeros((1, W, C), xbuf.dtype)

    # Bottom halo row (image row row0 + th_in - 2).
    bot = row0 + th_in - 2

    @pl.when(bot < H)
    def _():
        pltpu.make_async_copy(x_any.at[n, pl.ds(bot, 1)],
                              xbuf.at[pl.ds(th_in - 1, 1), pl.ds(1, W)],
                              sem.at[2]).start()

    @pl.when(bot >= H)
    def _():
        xbuf[th_in - 1:th_in, 1:W + 1, :] = jnp.zeros((1, W, C), xbuf.dtype)

    cp_mid.wait()

    @pl.when(row0 > 0)
    def _():
        pltpu.make_async_copy(x_any.at[n, pl.ds(row0 - 1, 1)],
                              xbuf.at[pl.ds(0, 1), pl.ds(1, W)],
                              sem.at[1]).wait()

    @pl.when(bot < H)
    def _():
        pltpu.make_async_copy(x_any.at[n, pl.ds(bot, 1)],
                              xbuf.at[pl.ds(th_in - 1, 1), pl.ds(1, W)],
                              sem.at[2]).wait()

    xs = xbuf[...]                             # (th_in, W+2, C) bf16 strip
    w = w_ref[...].astype(jnp.float32)         # (3, 3, C), BN scale folded
    acc = jnp.zeros((th, Wo, C), jnp.float32)  # small strip acc, stays in vregs
    for kh in range(3):                        # fully unrolled 9 taps
        for kw in range(3):
            win = lax.slice(xs, (kh, kw, 0),
                            (kh + stride * (th - 1) + 1,
                             kw + stride * (Wo - 1) + 1, C),
                            (stride, stride, 1))
            acc = acc + win.astype(jnp.float32) * w[kh, kw, :]
    acc = acc + b_ref[...]
    o_ref[0] = jnp.maximum(acc, 0.0).astype(o_ref.dtype)


# ---------------------------------------------------------------------------
# Tiling helpers
# ---------------------------------------------------------------------------
def _pick_tm(M):
    """Large M tiles (bandwidth), but >=2 grid steps when possible (megacore)."""
    if M >= 2048 and M % 8 == 0:
        return 512
    if M >= 512 and M % 8 == 0:
        return 256
    return M  # single full-extent block (always layout-legal)


def _pick_th(Ho):
    """Output-row tile for the depthwise kernel (prefer ~8 rows)."""
    for cand in (8, 16, 4, 32, 2, 64, 1):
        if cand <= Ho and Ho % cand == 0:
            return cand
    return Ho


# ---------------------------------------------------------------------------
# Wrappers around pallas_call
# ---------------------------------------------------------------------------
def conv1x1_bias_act(x, w, b, *, relu):
    """x: (N,H,W,Cin) bf16, w: (Cin,Cout) bf16 (BN scale folded), b: (Cout,) f32."""
    N, H, W, Cin = x.shape
    Cout = w.shape[1]
    M = N * H * W
    tm = _pick_tm(M)
    x2 = x.reshape(M, Cin)
    b2 = b.reshape(1, Cout).astype(jnp.float32)
    out = pl.pallas_call(
        functools.partial(_mm_bias_act_kernel, relu=relu),
        out_shape=jax.ShapeDtypeStruct((M, Cout), _BF16),
        grid=(pl.cdiv(M, tm),),
        in_specs=[pl.BlockSpec((tm, Cin), lambda i: (i, 0)),
                  pl.BlockSpec((Cin, Cout), lambda i: (0, 0)),
                  pl.BlockSpec((1, Cout), lambda i: (0, 0))],
        out_specs=pl.BlockSpec((tm, Cout), lambda i: (i, 0)),
        compiler_params=pltpu.CompilerParams(dimension_semantics=("parallel",)),
    )(x2, w, b2)
    return out.reshape(N, H, W, Cout)


def conv_c_proj_residual_relu(y, x_short, wc, wp, b, out_dtype):
    """Fused conv_c + projection shortcut + residual add + ReLU.

    y: (N,Ho,Wo,w_b) depthwise output (bf16); x_short: (N,Ho,Wo,Cin) shortcut
    input (bf16). Returns relu(y@wc + x_short@wp + b) as (N,Ho,Wo,Cout).
    """
    N, Ho, Wo, Cb = y.shape
    Cin = x_short.shape[-1]
    Cout = wc.shape[1]
    M = N * Ho * Wo
    tm = _pick_tm(M)
    y2 = y.reshape(M, Cb)
    x2 = x_short.reshape(M, Cin)
    b2 = b.reshape(1, Cout).astype(jnp.float32)
    out = pl.pallas_call(
        _mm2_bias_relu_kernel,
        out_shape=jax.ShapeDtypeStruct((M, Cout), out_dtype),
        grid=(pl.cdiv(M, tm),),
        in_specs=[pl.BlockSpec((tm, Cb), lambda i: (i, 0)),
                  pl.BlockSpec((Cb, Cout), lambda i: (0, 0)),
                  pl.BlockSpec((tm, Cin), lambda i: (i, 0)),
                  pl.BlockSpec((Cin, Cout), lambda i: (0, 0)),
                  pl.BlockSpec((1, Cout), lambda i: (0, 0))],
        out_specs=pl.BlockSpec((tm, Cout), lambda i: (i, 0)),
        compiler_params=pltpu.CompilerParams(dimension_semantics=("parallel",)),
    )(y2, wc, x2, wp, b2)
    return out.reshape(N, Ho, Wo, Cout)


def dwconv3x3_bias_relu(x, w, b, *, stride):
    """Depthwise 3x3 conv, padding=1. x: (N,H,W,C) bf16, w: (3,3,C) bf16, b: (C,) f32."""
    N, H, W, C = x.shape
    Ho = (H - 1) // stride + 1
    Wo = (W - 1) // stride + 1
    th = _pick_th(Ho)
    T = Ho // th
    th_in = (th - 1) * stride + 3
    b2 = b.reshape(1, C).astype(jnp.float32)
    kernel = functools.partial(_dw3x3_bias_relu_kernel, stride=stride, th=th,
                               H=H, W=W, Wo=Wo)
    return pl.pallas_call(
        kernel,
        out_shape=jax.ShapeDtypeStruct((N, Ho, Wo, C), _BF16),
        grid=(N, T),
        in_specs=[pl.BlockSpec(memory_space=pl.ANY),               # full image in HBM
                  pl.BlockSpec((3, 3, C), lambda n, t: (0, 0, 0)),
                  pl.BlockSpec((1, C), lambda n, t: (0, 0))],
        out_specs=pl.BlockSpec((1, th, Wo, C), lambda n, t: (n, t, 0, 0)),
        scratch_shapes=[pltpu.VMEM((th_in, W + 2, C), _BF16),
                        pltpu.SemaphoreType.DMA((3,))],
        compiler_params=pltpu.CompilerParams(
            dimension_semantics=("parallel", "parallel")),
    )(x, w, b2)


# ---------------------------------------------------------------------------
# ResBottleneckBlock forward (JAX glue around the Pallas kernels)
# ---------------------------------------------------------------------------
def make_params(key, width_in, width_out, bottleneck_multiplier=1.0):
    w_b = int(round(width_out * bottleneck_multiplier))
    ks = jax.random.split(key, 8)

    def bn(kk, c):
        # folded BatchNorm (inference form): y = x * scale + bias
        gamma = 1.0 + 0.1 * jax.random.normal(kk, (c,), jnp.float32)
        beta = 0.05 * jax.random.normal(jax.random.fold_in(kk, 1), (c,), jnp.float32)
        mean = 0.02 * jax.random.normal(jax.random.fold_in(kk, 2), (c,), jnp.float32)
        var = jnp.abs(1.0 + 0.1 * jax.random.normal(jax.random.fold_in(kk, 3), (c,), jnp.float32))
        scale = gamma / jnp.sqrt(var + 1e-5)
        return scale, beta - mean * scale

    p = {}
    p["wa"] = 0.1 * jax.random.normal(ks[0], (width_in, w_b), jnp.float32)        # 1x1
    p["bn_a"] = bn(ks[1], w_b)
    p["wb"] = 0.1 * jax.random.normal(ks[2], (3, 3, w_b), jnp.float32)            # depthwise 3x3
    p["bn_b"] = bn(ks[3], w_b)
    p["wc"] = 0.1 * jax.random.normal(ks[4], (w_b, width_out), jnp.float32)       # 1x1
    p["bn_c"] = bn(ks[5], width_out)
    p["wp"] = 0.1 * jax.random.normal(ks[6], (width_in, width_out), jnp.float32)  # proj 1x1
    p["bn_p"] = bn(ks[7], width_out)
    return p, w_b


def res_bottleneck_block_forward(x_nchw, params, *, width_in, width_out, stride,
                                 group_width=1, bottleneck_multiplier=1.0,
                                 temperature=1.0):
    """Mirrors ResBottleneckBlock.forward with identity dynamic masks.

    Returns (out_nchw, spatial_sparsity_conv3_list, spatial_sparsity_conv2_list,
             spatial_sparsity_conv1_list, channel_sparsity_list,
             flops_perc_list, flops).
    """
    del temperature  # masks are identity here (masker sources unavailable)
    p = params
    w_b = int(round(width_out * bottleneck_multiplier))
    g = w_b // group_width
    assert g == w_b, "kernel implements the depthwise case (group_width=1)"

    in_dtype = x_nchw.dtype
    # NCHW -> NHWC and bf16 storage (fuses into a single XLA transpose+convert).
    x = jnp.transpose(x_nchw, (0, 2, 3, 1)).astype(_BF16)

    # Fold BN scales into the conv weights once (host/XLA side, tiny).
    sa, ba = p["bn_a"]
    wa = (p["wa"] * sa[None, :]).astype(_BF16)
    sb, bb = p["bn_b"]
    wdw = (p["wb"] * sb[None, None, :]).astype(_BF16)
    sc, bc = p["bn_c"]
    wc = (p["wc"] * sc[None, :]).astype(_BF16)
    sp_, bp = p["bn_p"]
    wp = (p["wp"] * sp_[None, :]).astype(_BF16)

    # --- sparsities / mask flops (identity masks) ---------------------------
    channel_sparsity = jnp.float32(1.0)
    spatial_sparsity_conv1 = jnp.float32(1.0)
    spatial_sparsity_conv2 = jnp.float32(1.0)
    spatial_sparsity_conv3 = jnp.float32(1.0)
    channel_mask_flops = jnp.float32(0.0)   # TODO(synk): Masker_channel flops
    spatial_mask_flops = jnp.float32(0.0)   # TODO(synk): Masker_spatial flops
    sparse_flops = channel_mask_flops + spatial_mask_flops
    dense_flops = channel_mask_flops + spatial_mask_flops
    flops = jnp.float32(0.0)

    conv1_fpp = width_in * w_b
    conv2_fpp = w_b * w_b * 9 // g
    conv3_fpp = w_b * width_out
    se_fpp = 0.0  # se_ratio is None

    # --- f = BottleneckTransform --------------------------------------------
    out = conv1x1_bias_act(x, wa, ba, relu=True)                        # conv a
    h1, w1 = out.shape[1], out.shape[2]
    dense_flops += conv1_fpp * h1 * w1
    sparse_flops += conv1_fpp * h1 * w1 * channel_sparsity * spatial_sparsity_conv1

    out = dwconv3x3_bias_relu(out, wdw, bb, stride=stride)              # conv b
    h2, w2 = out.shape[1], out.shape[2]
    dense_flops += conv2_fpp * h2 * w2
    sparse_flops += conv2_fpp * h2 * w2 * channel_sparsity ** 2 * spatial_sparsity_conv2

    flops += se_fpp                                                     # (no SE)

    # conv c + projection shortcut + residual + final ReLU, fully fused so the
    # (N,Ho,Wo,width_out) intermediate never hits HBM.
    if stride == 1:
        x_short = x
    else:
        # TODO(synk): fold the strided shortcut subsampling into the fused
        # kernel's BlockSpec/DMA instead of this XLA-level strided slice.
        x_short = x[:, ::stride, ::stride, :]
    y = conv_c_proj_residual_relu(out, x_short, wc, wp, bc + bp, in_dtype)
    h3, w3 = y.shape[1], y.shape[2]
    dense_flops += conv3_fpp * h3 * w3
    sparse_flops += conv3_fpp * h3 * w3 * channel_sparsity * spatial_sparsity_conv3
    flops += sparse_flops

    downsample_flops = width_in * width_out
    sparse_flops += downsample_flops * h3 * w3
    dense_flops += downsample_flops * h3 * w3
    flops += downsample_flops * h3 * w3

    flops_perc = sparse_flops / dense_flops

    out_nchw = jnp.transpose(y, (0, 3, 1, 2))  # back to NCHW (input dtype)
    return (out_nchw,
            spatial_sparsity_conv3[None],
            spatial_sparsity_conv2[None],
            spatial_sparsity_conv1[None],
            channel_sparsity[None],
            flops_perc[None],
            flops)


# ---------------------------------------------------------------------------
if __name__ == "__main__":
    key = jax.random.PRNGKey(0)
    k_x, k_p = jax.random.split(key)

    N, width_in, width_out, H, W, stride = 2, 8, 16, 16, 16, 1
    x = jax.random.normal(k_x, (N, width_in, H, W), jnp.float32)  # NCHW input
    params, w_b = make_params(k_p, width_in, width_out)

    outs = res_bottleneck_block_forward(
        x, params, width_in=width_in, width_out=width_out, stride=stride,
        group_width=1, bottleneck_multiplier=1.0, temperature=1.0)

    out = jax.block_until_ready(outs[0])
    for o in outs[1:]:
        jax.block_until_ready(o)

    assert out.shape == (N, width_out, H // stride, W // stride)
    assert bool(jnp.all(jnp.isfinite(out)))
    print("KERNEL_OK")
</pallas_src>

<mosaic_0001>
module attributes {stable_mosaic.version = 11 : i64} {
  func.func @_mm_bias_act_kernel(%arg0: i32, %arg1: memref<256x8xbf16, #tpu.memory_space<vmem>>, %arg2: memref<8x16xbf16, #tpu.memory_space<vmem>>, %arg3: memref<1x16xf32, #tpu.memory_space<vmem>>, %arg4: memref<256x16xbf16, #tpu.memory_space<vmem>>) attributes {dimension_semantics = [#tpu.dimension_semantics<parallel>], iteration_bounds = array<i64: 2>, scalar_prefetch = 0 : i64, scratch_operands = 0 : i64, tpu.core_type = #tpu.core_type<tc>, window_params = [{transform_indices = @transform_0, window_bounds = array<i64: 256, 8>}, {pipeline_mode = #tpu.pipeline_mode<synchronous>, transform_indices = @transform_1, window_bounds = array<i64: 8, 16>}, {pipeline_mode = #tpu.pipeline_mode<synchronous>, transform_indices = @transform_2, window_bounds = array<i64: 1, 16>}, {transform_indices = @transform_3, window_bounds = array<i64: 256, 16>}]} {
    %c0 = arith.constant 0 : index
    %c0_0 = arith.constant 0 : index
    %0 = vector.load %arg1[%c0, %c0_0] : memref<256x8xbf16, #tpu.memory_space<vmem>>, vector<256x8xbf16>
    %c0_1 = arith.constant 0 : index
    %c0_2 = arith.constant 0 : index
    %1 = vector.load %arg2[%c0_1, %c0_2] : memref<8x16xbf16, #tpu.memory_space<vmem>>, vector<8x16xbf16>
    %cst = arith.constant dense<0.000000e+00> : vector<256x16xf32>
    %2 = tpu.matmul %0, %1, %cst {dimension_numbers = #tpu.dot_dimension_numbers<[1], [0], [0], [1], [0, 0, 1, 1], [], []>} : vector<256x8xbf16>, vector<8x16xbf16>, vector<256x16xf32> -> vector<256x16xf32>
    %c0_3 = arith.constant 0 : index
    %c0_4 = arith.constant 0 : index
    %3 = vector.load %arg3[%c0_3, %c0_4] : memref<1x16xf32, #tpu.memory_space<vmem>>, vector<1x16xf32>
    %4 = vector.broadcast %3 : vector<1x16xf32> to vector<256x16xf32>
    %5 = arith.addf %2, %4 : vector<256x16xf32>
    %cst_5 = arith.constant 0.000000e+00 : f32
    %6 = vector.broadcast %cst_5 : f32 to vector<256x16xf32>
    %7 = arith.maximumf %5, %6 : vector<256x16xf32>
    %8 = arith.truncf %7 : vector<256x16xf32> to vector<256x16xbf16>
    %c0_6 = arith.constant 0 : index
    %c0_7 = arith.constant 0 : index
    %9 = vector.load %arg4[%c0_6, %c0_7] : memref<256x16xbf16, #tpu.memory_space<vmem>>, vector<256x16xbf16>
    tpu.vector_store %arg4[%c0_6, %c0_7], %8 {strides = array<i32>} : memref<256x16xbf16, #tpu.memory_space<vmem>>, vector<256x16xbf16>,
    return
  }
  func.func @transform_0(%arg0: i32) -> (i32, i32) {
    %c0_i32 = arith.constant 0 : i32
    %c0_i32_0 = arith.constant 0 : i32
    return %arg0, %c0_i32 : i32, i32
  }
  func.func @transform_1(%arg0: i32) -> (i32, i32) {
    %c0_i32 = arith.constant 0 : i32
    %c0_i32_0 = arith.constant 0 : i32
    %c0_i32_1 = arith.constant 0 : i32
    return %c0_i32, %c0_i32_0 : i32, i32
  }
  func.func @transform_2(%arg0: i32) -> (i32, i32) {
    %c0_i32 = arith.constant 0 : i32
    %c0_i32_0 = arith.constant 0 : i32
    %c0_i32_1 = arith.constant 0 : i32
    return %c0_i32, %c0_i32_0 : i32, i32
  }
  func.func @transform_3(%arg0: i32) -> (i32, i32) {
    %c0_i32 = arith.constant 0 : i32
    %c0_i32_0 = arith.constant 0 : i32
    return %arg0, %c0_i32 : i32, i32
  }
}

</mosaic_0001>

<llo_original>
// kernel: tpu_custom_call.1
$region0: #{tpu_custom_call.1}
  #allocation0 [shape = 'u32[]', space=smem, size = 0x4, offset = 0x4, fixed_abs, tag = 'smem constant byte address 0x4 - core index']
  #allocation1 [shape = 'u32[144,128]{1,0:T(1,128)}', space=vmem, size = 0x12000, scoped, tag = 'internal scratch']
  %s0 = inlined_call_operand.vmem [shape: bf16[512,8], index: 0, kind: input, shape index: {}]
  %s1 = inlined_call_operand.vmem [shape: bf16[8,16], index: 1, kind: input, shape index: {}]
  %s2 = inlined_call_operand.vmem [shape: f32[1,16], index: 2, kind: input, shape index: {}]
  %s3 = inlined_call_operand.vmem [shape: bf16[512,16], index: 3, kind: output, shape index: {}]
  %s4 = sld [smem:[#allocation0]]
  $region45: #{tpu_custom_call.1} parent=0
    _
  %s6 = ssub.s32 1, %s4
  %s7 = scalar_select 0, %s6, %s4
  loop: start=0, step=1, limit=4
  $region2: #{tpu_custom_call.1} parent=0 // loop_pre_header
    _
  $region3: #{tpu_custom_call.1} parent=0 // loop_header
    %s9 = sphi 0, %s13
    %p10 = scmp.ge.s32.totalorder %s9, 4
    %s19 = sphi 0, %s21
    %s22 = sphi 0, %s19
    %s23 = sphi 0, %s22
    %s39 = sphi 0, %s23
    %s43 = sphi 0, %s43
    %s45 = sphi 0, %s43
    %s46 = sphi 0, %s45
    %s60 = sphi 0, %s46
    %s64 = sphi 0, %s64
    %s66 = sphi 0, %s64
    %s67 = sphi 0, %s66
    %s81 = sphi 0, %s67
    %s87 = sphi 0, %s89
    %s90 = sphi 0, %s87
    %s91 = sphi 0, %s90
    %s107 = sphi 0, %s91
  $region4: #{tpu_custom_call.1} parent=0 // loop_header_branch
    %12 = sbr.rel (%p10) target = $region8
  $region5: #{tpu_custom_call.1} parent=0 // loop_body
    %s14 = ssub.s32 %s9, 1
    %s15 = ssub.s32 %s9, 2
    %s16 = sadd.s32 %s9, 1
    %s17 = ssub.s32 %s9, %s16
    %p18 = scmp.eq.s32.totalorder %s17, 0
    %s20 = sadd.s32 %s19, 1
    %s21 = scalar_select %p18, %s19, %s20
    %p24 = pneg %p18
    %p25 = scmp.eq.s32.totalorder %s9, 1
    %p26 = por %p24, %p25
    %p27 = scmp.ne.s32.totalorder %s19, %s22
    %p28 = scmp.eq.s32.totalorder %s9, 0
    %p29 = por %p27, %p28
    %p30 = scmp.ne.s32.totalorder %s19, %s22
    %p31 = scmp.eq.s32.totalorder %s14, 1
    %p32 = por %p30, %p31
    %p33 = scmp.ne.s32.totalorder %s22, %s23
    %p34 = scmp.eq.s32.totalorder %s14, 0
    %p35 = por %p33, %p34
    %p36 = scmp.ne.s32.totalorder %s22, %s23
    %p37 = scmp.eq.s32.totalorder %s15, 1
    %p38 = por %p36, %p37
    %p40 = scmp.ne.s32.totalorder %s23, %s39
    %p41 = scmp.eq.s32.totalorder %s15, 0
    %p42 = por %p40, %p41
    %s44 = sadd.s32 %s43, 1
    %p47 = scmp.eq.s32.totalorder %s9, 1
    %p48 = scmp.ne.s32.totalorder %s43, %s45
    %p49 = scmp.eq.s32.totalorder %s9, 0
    %p50 = por %p48, %p49
    %p51 = scmp.ne.s32.totalorder %s43, %s45
    %p52 = scmp.eq.s32.totalorder %s14, 1
    %p53 = por %p51, %p52
    %p54 = scmp.ne.s32.totalorder %s45, %s46
    %p55 = scmp.eq.s32.totalorder %s14, 0
    %p56 = por %p54, %p55
    %p57 = scmp.ne.s32.totalorder %s45, %s46
    %p58 = scmp.eq.s32.totalorder %s15, 1
    %p59 = por %p57, %p58
    %p61 = scmp.ne.s32.totalorder %s46, %s60
    %p62 = scmp.eq.s32.totalorder %s15, 0
    %p63 = por %p61, %p62
    %s65 = sadd.s32 %s64, 1
    %p68 = scmp.eq.s32.totalorder %s9, 1
    %p69 = scmp.ne.s32.totalorder %s64, %s66
    %p70 = scmp.eq.s32.totalorder %s9, 0
    %p71 = por %p69, %p70
    %p72 = scmp.ne.s32.totalorder %s64, %s66
    %p73 = scmp.eq.s32.totalorder %s14, 1
    %p74 = por %p72, %p73
    %p75 = scmp.ne.s32.totalorder %s66, %s67
    %p76 = scmp.eq.s32.totalorder %s14, 0
    %p77 = por %p75, %p76
    %p78 = scmp.ne.s32.totalorder %s66, %s67
    %p79 = scmp.eq.s32.totalorder %s15, 1
    %p80 = por %p78, %p79
    %p82 = scmp.ne.s32.totalorder %s67, %s81
    %p83 = scmp.eq.s32.totalorder %s15, 0
    %p84 = por %p82, %p83
    %s85 = ssub.s32 %s9, %s16
    %p86 = scmp.eq.s32.totalorder %s85, 0
    %s88 = sadd.s32 %s87, 1
    %s89 = scalar_select %p86, %s87, %s88
    %p92 = pneg %p86
    %p93 = scmp.eq.s32.totalorder %s9, 1
    %p94 = por %p92, %p93
    %p95 = scmp.ne.s32.totalorder %s87, %s90
    %p96 = scmp.eq.s32.totalorder %s9, 0
    %p97 = por %p95, %p96
    %p98 = scmp.ne.s32.totalorder %s87, %s90
    %p99 = scmp.eq.s32.totalorder %s14, 1
    %p100 = por %p98, %p99
    %p101 = scmp.ne.s32.totalorder %s90, %s91
    %p102 = scmp.eq.s32.totalorder %s14, 0
    %p103 = por %p101, %p102
    %p104 = scmp.ne.s32.totalorder %s90, %s91
    %p105 = scmp.eq.s32.totalorder %s15, 1
    %p106 = por %p104, %p105
    %p108 = scmp.ne.s32.totalorder %s91, %s107
    %p109 = scmp.eq.s32.totalorder %s15, 0
    %p110 = por %p108, %p109
    %p111 = scmp.le.s32.totalorder 1, %s9
    %p112 = scmp.lt.s32.totalorder %s9, 3
    %p113 = pnand %p111, %p112
    %p114 = pneg %p113
    // Predicated region
    $region9: #{tpu_custom_call.1} parent=5 // pred_check
      _
    $region10: #{tpu_custom_call.1} parent=5 // pred_check_branch
      %116 = sbr.rel (%p113) target = $region12
    $region11: #{tpu_custom_call.1} parent=5 // pred_region
      %s117 = ssub.s32 %s9, 1
      // Predicated region
      $region13: #{tpu_custom_call.1} parent=11 // pred_check
        %p118 = pneg %p56
      $region14: #{tpu_custom_call.1} parent=11 // pred_check_branch
        %120 = sbr.rel (%p118) target = $region16
      $region15: #{tpu_custom_call.1} parent=11 // pred_region
        _
      $region16: #{tpu_custom_call.1} parent=11 // pred_fallthru
        _
      // Predicated region
      $region17: #{tpu_custom_call.1} parent=11 // pred_check
        %p121 = pneg %p77
      $region18: #{tpu_custom_call.1} parent=11 // pred_check_branch
        %123 = sbr.rel (%p121) target = $region20
      $region19: #{tpu_custom_call.1} parent=11 // pred_region
        _
      $region20: #{tpu_custom_call.1} parent=11 // pred_fallthru
        _
    $region12: #{tpu_custom_call.1} parent=5 // pred_fallthru
      _
    %p124 = scmp.lt.s32.totalorder %s9, 2
    // Predicated region
    $region21: #{tpu_custom_call.1} parent=5 // pred_check
      %p125 = pneg %p124
    $region22: #{tpu_custom_call.1} parent=5 // pred_check_branch
      %127 = sbr.rel (%p125) target = $region24
    $region23: #{tpu_custom_call.1} parent=5 // pred_region
      // Predicated region
      $region25: #{tpu_custom_call.1} parent=23 // pred_check
        %p128 = pneg %p29
      $region26: #{tpu_custom_call.1} parent=23 // pred_check_branch
        %130 = sbr.rel (%p128) target = $region28
      $region27: #{tpu_custom_call.1} parent=23 // pred_region
        %s131 = smul.u32 32, %s9
        %p132 = scmp.lt.s32.totalorder %s131, 63
        %s133 = scalar_select %p132, %s131, 63
        %s134 = smul.addr %s133, 4
        %s135 = scalar_lea.vmem %s0, %s134
        %s136 = smul.u32 32, %s9
      $region28: #{tpu_custom_call.1} parent=23 // pred_fallthru
        _
    $region24: #{tpu_custom_call.1} parent=5 // pred_fallthru
      _
    %p137 = scmp.le.s32.totalorder 1, %s9
    %p138 = scmp.lt.s32.totalorder %s9, 3
    %p139 = pnand %p137, %p138
    %p140 = pneg %p139
    // Predicated region
    $region29: #{tpu_custom_call.1} parent=5 // pred_check
      _
    $region30: #{tpu_custom_call.1} parent=5 // pred_check_branch
      %142 = sbr.rel (%p139) target = $region32
    $region31: #{tpu_custom_call.1} parent=5 // pred_region
      %s143 = ssub.s32 %s9, 1
      %s144 = smul.u32 32, %s14
      %p145 = scmp.lt.s32.totalorder %s144, 63
      %s146 = scalar_select %p145, %s144, 63
      %s147 = smul.addr %s146, 4
      %s148 = scalar_lea.vmem %s0, %s147
      %p149 = pneg %p35
      %p150 = pneg %p32
      %p151 = pneg %p56
      %p152 = pneg %p53
      %p153 = pneg %p77
      %p154 = pneg %p74
      %p155 = pneg %p103
      %p156 = pneg %p100
      %s157 = smul.u32 32, %s14
      %p158 = scmp.lt.s32.totalorder %s157, 63
      %s159 = scalar_select %p158, %s157, 63
      %s160 = smul.addr %s159, 4
      %s161 = scalar_lea.vmem %s3, %s160
      %s162 = smul.u32 32, %s14
      %p163 = scmp.lt.s32.totalorder %s162, 63
      %s164 = scalar_select %p163, %s162, 63
      %s165 = smul.addr %s164, 4
      %s166 = scalar_lea.vmem %s0, %s165
      %s167 = smul.u32 32, %s14
      %s168 = smul.u32 32, %s14
      %p169 = scmp.lt.s32.totalorder %s168, 63
      %s170 = scalar_select %p169, %s168, 63
      %s171 = smul.addr %s170, 4
      %s172 = scalar_lea.vmem %s3, %s171
      %s173 = smul.u32 32, %s14
      %v175 = vld [vmem:[%s166] sm:$0xf]
      %v176 = vld [vmem:[%s166 + $0x4] sm:$0xf]
      %v177 = vld [vmem:[%s166 + $0x8] sm:$0xf]
      %v178 = vld [vmem:[%s166 + $0xc] sm:$0xf]
      %v179 = vld [vmem:[%s166 + $0x10] sm:$0xf]
      %v180 = vld [vmem:[%s166 + $0x14] sm:$0xf]
      %v181 = vld [vmem:[%s166 + $0x18] sm:$0xf]
      %v182 = vld [vmem:[%s166 + $0x1c] sm:$0xf]
      %v183 = vld [vmem:[%s166 + $0x20] sm:$0xf]
      %v184 = vld [vmem:[%s166 + $0x24] sm:$0xf]
      %v185 = vld [vmem:[%s166 + $0x28] sm:$0xf]
      %v186 = vld [vmem:[%s166 + $0x2c] sm:$0xf]
      %v187 = vld [vmem:[%s166 + $0x30] sm:$0xf]
      %v188 = vld [vmem:[%s166 + $0x34] sm:$0xf]
      %v189 = vld [vmem:[%s166 + $0x38] sm:$0xf]
      %v190 = vld [vmem:[%s166 + $0x3c] sm:$0xf]
      %v191 = vld [vmem:[%s166 + $0x40] sm:$0xf]
      %v192 = vld [vmem:[%s166 + $0x44] sm:$0xf]
      %v193 = vld [vmem:[%s166 + $0x48] sm:$0xf]
      %v194 = vld [vmem:[%s166 + $0x4c] sm:$0xf]
      %v195 = vld [vmem:[%s166 + $0x50] sm:$0xf]
      %v196 = vld [vmem:[%s166 + $0x54] sm:$0xf]
      %v197 = vld [vmem:[%s166 + $0x58] sm:$0xf]
      %v198 = vld [vmem:[%s166 + $0x5c] sm:$0xf]
      %v199 = vld [vmem:[%s166 + $0x60] sm:$0xf]
      %v200 = vld [vmem:[%s166 + $0x64] sm:$0xf]
      %v201 = vld [vmem:[%s166 + $0x68] sm:$0xf]
      %v202 = vld [vmem:[%s166 + $0x6c] sm:$0xf]
      %v203 = vld [vmem:[%s166 + $0x70] sm:$0xf]
      %v204 = vld [vmem:[%s166 + $0x74] sm:$0xf]
      %v205 = vld [vmem:[%s166 + $0x78] sm:$0xf]
      %v206 = vld [vmem:[%s166 + $0x7c] sm:$0xf]
      %v207 = vld [vmem:[%s1] sm:$0xf]
      %v208 = vld [vmem:[%s2] sm:$0x1]
      %v210 = vlaneseq
      %v211 = vshrl.u32 %v210, 7
      %v212 = vsub.s32 0, %v211
      %v213 = vrot.slane %v208, %v212
      %v247 = vunpack.c.l.b16 %v175
      %v248 = vunpack.c.l.b16 %v176
      %v249 = vunpack.c.l.b16 %v177
      %v250 = vunpack.c.l.b16 %v178
      %v251 = vunpack.c.l.b16 %v179
      %v252 = vunpack.c.l.b16 %v180
      %v253 = vunpack.c.l.b16 %v181
      %v254 = vunpack.c.l.b16 %v182
      %v255 = vunpack.c.l.b16 %v183
      %v256 = vunpack.c.l.b16 %v184
      %v257 = vunpack.c.l.b16 %v185
      %v258 = vunpack.c.l.b16 %v186
      %v259 = vunpack.c.l.b16 %v187
      %v260 = vunpack.c.l.b16 %v188
      %v261 = vunpack.c.l.b16 %v189
      %v262 = vunpack.c.l.b16 %v190
      %v263 = vunpack.c.l.b16 %v191
      %v264 = vunpack.c.l.b16 %v192
      %v265 = vunpack.c.l.b16 %v193
      %v266 = vunpack.c.l.b16 %v194
      %v267 = vunpack.c.l.b16 %v195
      %v268 = vunpack.c.l.b16 %v196
      %v269 = vunpack.c.l.b16 %v197
      %v270 = vunpack.c.l.b16 %v198
      %v271 = vunpack.c.l.b16 %v199
      %v272 = vunpack.c.l.b16 %v200
      %v273 = vunpack.c.l.b16 %v201
      %v274 = vunpack.c.l.b16 %v202
      %v275 = vunpack.c.l.b16 %v203
      %v276 = vunpack.c.l.b16 %v204
      %v277 = vunpack.c.l.b16 %v205
      %v278 = vunpack.c.l.b16 %v206
      %v279 = vpack.c.b16 %v248, %v247
      %v280 = vpack.c.b16 %v250, %v249
      %v281 = vpack.c.b16 %v252, %v251
      %v282 = vpack.c.b16 %v254, %v253
      %v283 = vpack.c.b16 %v256, %v255
      %v284 = vpack.c.b16 %v258, %v257
      %v285 = vpack.c.b16 %v260, %v259
      %v286 = vpack.c.b16 %v262, %v261
      %v287 = vpack.c.b16 %v264, %v263
      %v288 = vpack.c.b16 %v266, %v265
      %v289 = vpack.c.b16 %v268, %v267
      %v290 = vpack.c.b16 %v270, %v269
      %v291 = vpack.c.b16 %v272, %v271
      %v292 = vpack.c.b16 %v274, %v273
      %v293 = vpack.c.b16 %v276, %v275
      %v294 = vpack.c.b16 %v278, %v277
      %vm295 = vcmask 64512
      %v297 = vsel %vm295, %v279, 0
      %v300 = vsel %vm295, %v280, 0
      %v303 = vsel %vm295, %v281, 0
      %v306 = vsel %vm295, %v282, 0
      %v309 = vsel %vm295, %v283, 0
      %v312 = vsel %vm295, %v284, 0
      %v315 = vsel %vm295, %v285, 0
      %v318 = vsel %vm295, %v286, 0
      %v321 = vsel %vm295, %v287, 0
      %v324 = vsel %vm295, %v288, 0
      %v327 = vsel %vm295, %v289, 0
      %v330 = vsel %vm295, %v290, 0
      %v333 = vsel %vm295, %v291, 0
      %v336 = vsel %vm295, %v292, 0
      %v339 = vsel %vm295, %v293, 0
      %v342 = vsel %vm295, %v294, 0
      %vm344 = vcmask 1043456
      %v346 = vsel %vm344, %v207, 0
      %348 = vmatprep.subr.bf16.mxu0 0
      %349 = vmatpush1.bf16.msra.mxu0 0
      %350 = vmatprep.subr.bf16.mxu0 0
      %351 = vmatpush1.bf16.msra.mxu0 0
      %352 = vmatprep.subr.bf16.mxu0 0
      %353 = vmatpush1.bf16.msra.mxu0 0
      %354 = vmatprep.subr.bf16.mxu0 0
      %355 = vmatpush1.bf16.msra.mxu0 0
      %356 = vmatprep.subr.bf16.mxu0 0
      %357 = vmatpush1.bf16.msra.mxu0 0
      %358 = vmatprep.subr.bf16.mxu0 0
      %359 = vmatpush1.bf16.msra.mxu0 0
      %360 = vmatprep.subr.bf16.mxu0 0
      %361 = vmatpush1.bf16.msra.mxu0 0
      %362 = vmatprep.subr.bf16.mxu0 0
      %363 = vmatpush1.bf16.msra.mxu0 %v346
      %364 = vmatprep.subr.bf16.mxu0 0
      %365 = vmatpush2.bf16.msra.mxu0 0
      %366 = vmatprep.subr.bf16.mxu0 0
      %367 = vmatpush2.bf16.msra.mxu0 0
      %368 = vmatprep.subr.bf16.mxu0 0
      %369 = vmatpush2.bf16.msra.mxu0 0
      %370 = vmatprep.subr.bf16.mxu0 0
      %371 = vmatpush2.bf16.msra.mxu0 0
      %372 = vmatprep.subr.bf16.mxu0 0
      %373 = vmatpush2.bf16.msra.mxu0 0
      %374 = vmatprep.subr.bf16.mxu0 0
      %375 = vmatpush2.bf16.msra.mxu0 0
      %376 = vmatprep.subr.bf16.mxu0 0
      %377 = vmatpush2.bf16.msra.mxu0 0
      %378 = vmatprep.subr.bf16.mxu0 0
      %379 = vmatpush2.bf16.msra.mxu0 0
      %380 = vmatprep.mubr.bf16.mxu0 0
      %381 = vmatmul.mubr.bf16.gmra.mxu0 %v297
      %v382 = vpop.f32.mrf.mxu0
      %v383 = vadd.f32 %v213, %v382
      %v384 = vpop.f32.mrf.mxu0
      %v385 = vpop.f32.mrf.mxu0
      %v386 = vadd.f32 %v213, %v385
      %v387 = vpop.f32.mrf.mxu0
      %388 = vmatprep.mubr.bf16.mxu0 0
      %389 = vmatmul.mubr.bf16.gmra.mxu0 %v300
      %v390 = vpop.f32.mrf.mxu0
      %v391 = vadd.f32 %v213, %v390
      %v392 = vpop.f32.mrf.mxu0
      %v393 = vpop.f32.mrf.mxu0
      %v394 = vadd.f32 %v213, %v393
      %v395 = vpop.f32.mrf.mxu0
      %396 = vmatprep.mubr.bf16.mxu0 0
      %397 = vmatmul.mubr.bf16.gmra.mxu0 %v303
      %v398 = vpop.f32.mrf.mxu0
      %v399 = vadd.f32 %v213, %v398
      %v400 = vpop.f32.mrf.mxu0
      %v401 = vpop.f32.mrf.mxu0
      %v402 = vadd.f32 %v213, %v401
      %v403 = vpop.f32.mrf.mxu0
      %404 = vmatprep.mubr.bf16.mxu0 0
      %405 = vmatmul.mubr.bf16.gmra.mxu0 %v306
      %v406 = vpop.f32.mrf.mxu0
      %v407 = vadd.f32 %v213, %v406
      %v408 = vpop.f32.mrf.mxu0
      %v409 = vpop.f32.mrf.mxu0
      %v410 = vadd.f32 %v213, %v409
      %v411 = vpop.f32.mrf.mxu0
      %412 = vmatprep.mubr.bf16.mxu0 0
      %413 = vmatmul.mubr.bf16.gmra.mxu0 %v309
      %v414 = vpop.f32.mrf.mxu0
      %v415 = vadd.f32 %v213, %v414
      %v416 = vpop.f32.mrf.mxu0
      %v417 = vpop.f32.mrf.mxu0
      %v418 = vadd.f32 %v213, %v417
      %v419 = vpop.f32.mrf.mxu0
      %420 = vmatprep.mubr.bf16.mxu0 0
      %421 = vmatmul.mubr.bf16.gmra.mxu0 %v312
      %v422 = vpop.f32.mrf.mxu0
      %v423 = vadd.f32 %v213, %v422
      %v424 = vpop.f32.mrf.mxu0
      %v425 = vpop.f32.mrf.mxu0
      %v426 = vadd.f32 %v213, %v425
      %v427 = vpop.f32.mrf.mxu0
      %428 = vmatprep.mubr.bf16.mxu0 0
      %429 = vmatmul.mubr.bf16.gmra.mxu0 %v315
      %v430 = vpop.f32.mrf.mxu0
      %v431 = vadd.f32 %v213, %v430
      %v432 = vpop.f32.mrf.mxu0
      %v433 = vpop.f32.mrf.mxu0
      %v434 = vadd.f32 %v213, %v433
      %v435 = vpop.f32.mrf.mxu0
      %436 = vmatprep.mubr.bf16.mxu0 0
      %437 = vmatmul.mubr.bf16.gmra.mxu0 %v318
      %v438 = vpop.f32.mrf.mxu0
      %v439 = vadd.f32 %v213, %v438
      %v440 = vpop.f32.mrf.mxu0
      %v441 = vpop.f32.mrf.mxu0
      %v442 = vadd.f32 %v213, %v441
      %v443 = vpop.f32.mrf.mxu0
      %444 = vmatprep.mubr.bf16.mxu0 0
      %445 = vmatmul.mubr.bf16.gmra.mxu0 %v321
      %v446 = vpop.f32.mrf.mxu0
      %v447 = vadd.f32 %v213, %v446
      %v448 = vpop.f32.mrf.mxu0
      %v449 = vpop.f32.mrf.mxu0
      %v450 = vadd.f32 %v213, %v449
      %v451 = vpop.f32.mrf.mxu0
      %452 = vmatprep.mubr.bf16.mxu0 0
      %453 = vmatmul.mubr.bf16.gmra.mxu0 %v324
      %v454 = vpop.f32.mrf.mxu0
      %v455 = vadd.f32 %v213, %v454
      %v456 = vpop.f32.mrf.mxu0
      %v457 = vpop.f32.mrf.mxu0
      %v458 = vadd.f32 %v213, %v457
      %v459 = vpop.f32.mrf.mxu0
      %460 = vmatprep.mubr.bf16.mxu0 0
      %461 = vmatmul.mubr.bf16.gmra.mxu0 %v327
      %v462 = vpop.f32.mrf.mxu0
      %v463 = vadd.f32 %v213, %v462
      %v464 = vpop.f32.mrf.mxu0
      %v465 = vpop.f32.mrf.mxu0
      %v466 = vadd.f32 %v213, %v465
      %v467 = vpop.f32.mrf.mxu0
      %468 = vmatprep.mubr.bf16.mxu0 0
      %469 = vmatmul.mubr.bf16.gmra.mxu0 %v330
      %v470 = vpop.f32.mrf.mxu0
      %v471 = vadd.f32 %v213, %v470
      %v472 = vpop.f32.mrf.mxu0
      %v473 = vpop.f32.mrf.mxu0
      %v474 = vadd.f32 %v213, %v473
      %v475 = vpop.f32.mrf.mxu0
      %476 = vmatprep.mubr.bf16.mxu0 0
      %477 = vmatmul.mubr.bf16.gmra.mxu0 %v333
      %v478 = vpop.f32.mrf.mxu0
      %v479 = vadd.f32 %v213, %v478
      %v480 = vpop.f32.mrf.mxu0
      %v481 = vpop.f32.mrf.mxu0
      %v482 = vadd.f32 %v213, %v481
      %v483 = vpop.f32.mrf.mxu0
      %484 = vmatprep.mubr.bf16.mxu0 0
      %485 = vmatmul.mubr.bf16.gmra.mxu0 %v336
      %v486 = vpop.f32.mrf.mxu0
      %v487 = vadd.f32 %v213, %v486
      %v488 = vpop.f32.mrf.mxu0
      %v489 = vpop.f32.mrf.mxu0
      %v490 = vadd.f32 %v213, %v489
      %v491 = vpop.f32.mrf.mxu0
      %492 = vmatprep.mubr.bf16.mxu0 0
      %493 = vmatmul.mubr.bf16.gmra.mxu0 %v339
      %v494 = vpop.f32.mrf.mxu0
      %v495 = vadd.f32 %v213, %v494
      %v496 = vpop.f32.mrf.mxu0
      %v497 = vpop.f32.mrf.mxu0
      %v498 = vadd.f32 %v213, %v497
      %v499 = vpop.f32.mrf.mxu0
      %500 = vmatprep.mubr.bf16.mxu0 0
      %501 = vmatmul.mubr.bf16.gmra.mxu0 %v342
      %v502 = vpop.f32.mrf.mxu0
      %v503 = vadd.f32 %v213, %v502
      %v504 = vpop.f32.mrf.mxu0
      %v505 = vpop.f32.mrf.mxu0
      %v506 = vadd.f32 %v213, %v505
      %v507 = vpop.f32.mrf.mxu0
      %508 = vdwg.mxu0
      %v509 = vmax.f32 %v383, 0.0
      %v510 = vmax.f32 %v386, 0.0
      %v511 = vmax.f32 %v391, 0.0
      %v512 = vmax.f32 %v394, 0.0
      %v513 = vmax.f32 %v399, 0.0
      %v514 = vmax.f32 %v402, 0.0
      %v515 = vmax.f32 %v407, 0.0
      %v516 = vmax.f32 %v410, 0.0
      %v517 = vmax.f32 %v415, 0.0
      %v518 = vmax.f32 %v418, 0.0
      %v519 = vmax.f32 %v423, 0.0
      %v520 = vmax.f32 %v426, 0.0
      %v521 = vmax.f32 %v431, 0.0
      %v522 = vmax.f32 %v434, 0.0
      %v523 = vmax.f32 %v439, 0.0
      %v524 = vmax.f32 %v442, 0.0
      %v525 = vmax.f32 %v447, 0.0
      %v526 = vmax.f32 %v450, 0.0
      %v527 = vmax.f32 %v455, 0.0
      %v528 = vmax.f32 %v458, 0.0
      %v529 = vmax.f32 %v463, 0.0
      %v530 = vmax.f32 %v466, 0.0
      %v531 = vmax.f32 %v471, 0.0
      %v532 = vmax.f32 %v474, 0.0
      %v533 = vmax.f32 %v479, 0.0
      %v534 = vmax.f32 %v482, 0.0
      %v535 = vmax.f32 %v487, 0.0
      %v536 = vmax.f32 %v490, 0.0
      %v537 = vmax.f32 %v495, 0.0
      %v538 = vmax.f32 %v498, 0.0
      %v539 = vmax.f32 %v503, 0.0
      %v540 = vmax.f32 %v506, 0.0
      %v541 = vpack.c.bf16 %v510, %v509
      %v542 = vpack.c.bf16 %v512, %v511
      %v543 = vpack.c.bf16 %v514, %v513
      %v544 = vpack.c.bf16 %v516, %v515
      %v545 = vpack.c.bf16 %v518, %v517
      %v546 = vpack.c.bf16 %v520, %v519
      %v547 = vpack.c.bf16 %v522, %v521
      %v548 = vpack.c.bf16 %v524, %v523
      %v549 = vpack.c.bf16 %v526, %v525
      %v550 = vpack.c.bf16 %v528, %v527
      %v551 = vpack.c.bf16 %v530, %v529
      %v552 = vpack.c.bf16 %v532, %v531
      %v553 = vpack.c.bf16 %v534, %v533
      %v554 = vpack.c.bf16 %v536, %v535
      %v555 = vpack.c.bf16 %v538, %v537
      %v556 = vpack.c.bf16 %v540, %v539
      %v573 = vunpack.c.l.b16 %v541
      %v574 = vunpack.c.h.b16 %v541
      %v575 = vunpack.c.l.b16 %v542
      %v576 = vunpack.c.h.b16 %v542
      %v577 = vunpack.c.l.b16 %v543
      %v578 = vunpack.c.h.b16 %v543
      %v579 = vunpack.c.l.b16 %v544
      %v580 = vunpack.c.h.b16 %v544
      %v581 = vunpack.c.l.b16 %v545
      %v582 = vunpack.c.h.b16 %v545
      %v583 = vunpack.c.l.b16 %v546
      %v584 = vunpack.c.h.b16 %v546
      %v585 = vunpack.c.l.b16 %v547
      %v586 = vunpack.c.h.b16 %v547
      %v587 = vunpack.c.l.b16 %v548
      %v588 = vunpack.c.h.b16 %v548
      %v589 = vunpack.c.l.b16 %v549
      %v590 = vunpack.c.h.b16 %v549
      %v591 = vunpack.c.l.b16 %v550
      %v592 = vunpack.c.h.b16 %v550
      %v593 = vunpack.c.l.b16 %v551
      %v594 = vunpack.c.h.b16 %v551
      %v595 = vunpack.c.l.b16 %v552
      %v596 = vunpack.c.h.b16 %v552
      %v597 = vunpack.c.l.b16 %v553
      %v598 = vunpack.c.h.b16 %v553
      %v599 = vunpack.c.l.b16 %v554
      %v600 = vunpack.c.h.b16 %v554
      %v601 = vunpack.c.l.b16 %v555
      %v602 = vunpack.c.h.b16 %v555
      %v603 = vunpack.c.l.b16 %v556
      %v604 = vunpack.c.h.b16 %v556
      %v605 = vpack.c.b16 %v573, %v573
      %v606 = vpack.c.b16 %v574, %v574
      %v607 = vpack.c.b16 %v575, %v575
      %v608 = vpack.c.b16 %v576, %v576
      %v609 = vpack.c.b16 %v577, %v577
      %v610 = vpack.c.b16 %v578, %v578
      %v611 = vpack.c.b16 %v579, %v579
      %v612 = vpack.c.b16 %v580, %v580
      %v613 = vpack.c.b16 %v581, %v581
      %v614 = vpack.c.b16 %v582, %v582
      %v615 = vpack.c.b16 %v583, %v583
      %v616 = vpack.c.b16 %v584, %v584
      %v617 = vpack.c.b16 %v585, %v585
      %v618 = vpack.c.b16 %v586, %v586
      %v619 = vpack.c.b16 %v587, %v587
      %v620 = vpack.c.b16 %v588, %v588
      %v621 = vpack.c.b16 %v589, %v589
      %v622 = vpack.c.b16 %v590, %v590
      %v623 = vpack.c.b16 %v591, %v591
      %v624 = vpack.c.b16 %v592, %v592
      %v625 = vpack.c.b16 %v593, %v593
      %v626 = vpack.c.b16 %v594, %v594
      %v627 = vpack.c.b16 %v595, %v595
      %v628 = vpack.c.b16 %v596, %v596
      %v629 = vpack.c.b16 %v597, %v597
      %v630 = vpack.c.b16 %v598, %v598
      %v631 = vpack.c.b16 %v599, %v599
      %v632 = vpack.c.b16 %v600, %v600
      %v633 = vpack.c.b16 %v601, %v601
      %v634 = vpack.c.b16 %v602, %v602
      %v635 = vpack.c.b16 %v603, %v603
      %v636 = vpack.c.b16 %v604, %v604
      %vm669 = vcmask 125952
      %670 = vst.msk [vmem:[%s172] sm:$0xf] %vm669, %v605
      %671 = vst.msk [vmem:[%s172 + $0x4] sm:$0xf] %vm669, %v606
      %672 = vst.msk [vmem:[%s172 + $0x8] sm:$0xf] %vm669, %v607
      %673 = vst.msk [vmem:[%s172 + $0xc] sm:$0xf] %vm669, %v608
      %674 = vst.msk [vmem:[%s172 + $0x10] sm:$0xf] %vm669, %v609
      %675 = vst.msk [vmem:[%s172 + $0x14] sm:$0xf] %vm669, %v610
      %676 = vst.msk [vmem:[%s172 + $0x18] sm:$0xf] %vm669, %v611
      %677 = vst.msk [vmem:[%s172 + $0x1c] sm:$0xf] %vm669, %v612
      %678 = vst.msk [vmem:[%s172 + $0x20] sm:$0xf] %vm669, %v613
      %679 = vst.msk [vmem:[%s172 + $0x24] sm:$0xf] %vm669, %v614
      %680 = vst.msk [vmem:[%s172 + $0x28] sm:$0xf] %vm669, %v615
      %681 = vst.msk [vmem:[%s172 + $0x2c] sm:$0xf] %vm669, %v616
      %682 = vst.msk [vmem:[%s172 + $0x30] sm:$0xf] %vm669, %v617
      %683 = vst.msk [vmem:[%s172 + $0x34] sm:$0xf] %vm669, %v618
      %684 = vst.msk [vmem:[%s172 + $0x38] sm:$0xf] %vm669, %v619
      %685 = vst.msk [vmem:[%s172 + $0x3c] sm:$0xf] %vm669, %v620
      %686 = vst.msk [vmem:[%s172 + $0x40] sm:$0xf] %vm669, %v621
      %687 = vst.msk [vmem:[%s172 + $0x44] sm:$0xf] %vm669, %v622
      %688 = vst.msk [vmem:[%s172 + $0x48] sm:$0xf] %vm669, %v623
      %689 = vst.msk [vmem:[%s172 + $0x4c] sm:$0xf] %vm669, %v624
      %690 = vst.msk [vmem:[%s172 + $0x50] sm:$0xf] %vm669, %v625
      %691 = vst.msk [vmem:[%s172 + $0x54] sm:$0xf] %vm669, %v626
      %692 = vst.msk [vmem:[%s172 + $0x58] sm:$0xf] %vm669, %v627
      %693 = vst.msk [vmem:[%s172 + $0x5c] sm:$0xf] %vm669, %v628
      %694 = vst.msk [vmem:[%s172 + $0x60] sm:$0xf] %vm669, %v629
      %695 = vst.msk [vmem:[%s172 + $0x64] sm:$0xf] %vm669, %v630
      %696 = vst.msk [vmem:[%s172 + $0x68] sm:$0xf] %vm669, %v631
      %697 = vst.msk [vmem:[%s172 + $0x6c] sm:$0xf] %vm669, %v632
      %698 = vst.msk [vmem:[%s172 + $0x70] sm:$0xf] %vm669, %v633
      %699 = vst.msk [vmem:[%s172 + $0x74] sm:$0xf] %vm669, %v634
      %700 = vst.msk [vmem:[%s172 + $0x78] sm:$0xf] %vm669, %v635
      %701 = vst.msk [vmem:[%s172 + $0x7c] sm:$0xf] %vm669, %v636
      %s702 = smul.u32 32, %s14
      %p703 = scmp.lt.s32.totalorder %s702, 63
      %s704 = scalar_select %p703, %s702, 63
      %s705 = smul.addr %s704, 4
      %s706 = scalar_lea.vmem %s3, %s705
      // Predicated region
      $region33: #{tpu_custom_call.1} parent=31 // pred_check
        %p707 = pneg %p100
      $region34: #{tpu_custom_call.1} parent=31 // pred_check_branch
        %709 = sbr.rel (%p707) target = $region36
      $region35: #{tpu_custom_call.1} parent=31 // pred_region
        %s710 = smul.u32 32, %s14
      $region36: #{tpu_custom_call.1} parent=31 // pred_fallthru
        _
    $region32: #{tpu_custom_call.1} parent=5 // pred_fallthru
      _
    %p711 = scmp.le.s32.totalorder 2, %s9
    // Predicated region
    $region37: #{tpu_custom_call.1} parent=5 // pred_check
      %p712 = pneg %p711
    $region38: #{tpu_custom_call.1} parent=5 // pred_check_branch
      %714 = sbr.rel (%p712) target = $region40
    $region39: #{tpu_custom_call.1} parent=5 // pred_region
      %s715 = ssub.s32 %s9, 2
      // Predicated region
      $region41: #{tpu_custom_call.1} parent=39 // pred_check
        %p716 = pneg %p106
      $region42: #{tpu_custom_call.1} parent=39 // pred_check_branch
        %718 = sbr.rel (%p716) target = $region44
      $region43: #{tpu_custom_call.1} parent=39 // pred_region
        %s719 = smul.u32 32, %s15
        %p720 = scmp.lt.s32.totalorder %s719, 63
        %s721 = scalar_select %p720, %s719, 63
        %s722 = smul.addr %s721, 4
        %s723 = scalar_lea.vmem %s3, %s722
      $region44: #{tpu_custom_call.1} parent=39 // pred_fallthru
        _
    $region40: #{tpu_custom_call.1} parent=5 // pred_fallthru
      _
  $region6: #{tpu_custom_call.1} parent=0 // loop_footer
    %s13 = sadd.s32 1, %s9
  $region7: #{tpu_custom_call.1} parent=0 // loop_footer_branch
    %8 = sbr.rel target = $region3
  $region8: #{tpu_custom_call.1} parent=0 // loop_exit
    _

</llo_original>
